<compile_context>
chip_gen: v5e
topology: v5e:2x2
jax: 0.10.0
libtpu: 0.0.40
codegen_flags: <defaults>
</compile_context>

<pallas_src>
import functools

import jax
import jax.numpy as jnp
from jax.experimental import pallas as pl
from jax.experimental.pallas import tpu as pltpu


def _mc_discounted_kernel(reward_ref, done_ref, out_ref, run_ref, *,
                          gamma: float, time_block: int, row_chunk: int):
    """One reversed time-block (`time_block` output planes) per grid step.

    reward_ref: (T, b_blk) f32      -- resident for the whole b-block
    done_ref  : (T, b_blk) f32      -- resident for the whole b-block
    out_ref   : (TT, T, b_blk) f32  -- TT output planes, outer-time [base, base+TT)
    run_ref   : (T, b_blk) f32 VMEM -- running value carried across grid steps
    """
    tb = pl.program_id(1)
    ntb = pl.num_programs(1)

    # New b-block scan: clear the running carry.  The time axis is the innermost
    # (sequential) grid axis, so this fires exactly once per b-block.
    @pl.when(tb == 0)
    def _():
        run_ref[...] = jnp.zeros_like(run_ref)

    seq_len = done_ref.shape[0]
    g = jnp.float32(gamma)
    # Smallest outer-time index covered by this grid step (reversed iteration).
    base = (ntb - 1 - tb) * time_block

    # Walk the (T, b_blk) carry slab in sublane-row chunks so the chunk's running
    # value and decay stay in vregs across the TT planes: run_ref / done_ref VMEM
    # traffic drops ~time_block x vs. one-plane-per-step, and the decay scratch is
    # gone (the two extra VPU ops are free; the kernel is HBM-write bound).
    # NOTE: static Python loops -> fine for small/medium T; trip count is
    # (T/row_chunk) * time_block unrolled bodies.
    for r0 in range(0, seq_len, row_chunk):
        rows = min(row_chunk, seq_len - r0)
        decay_c = (1.0 - done_ref[r0:r0 + rows, :]) * g     # (rows, b_blk)
        run_c = run_ref[r0:r0 + rows, :]                    # carry chunk (vregs)
        for k in range(time_block):
            j = time_block - 1 - k                          # reversed within block
            # reward row (base + j) broadcasts over the (rows, b_blk) chunk,
            # exactly matching `reward[i] + (1.0 - done) * gamma * running_add`.
            rew = reward_ref[pl.ds(base + j, 1), :]         # (1, b_blk)
            run_c = rew + decay_c * run_c
            out_ref[j, r0:r0 + rows, :] = run_c
        run_ref[r0:r0 + rows, :] = run_c                    # one store per chunk


def monte_carlo_discounted(reward: jax.Array, done: jax.Array,
                           gamma: float = 0.99) -> jax.Array:
    """Pallas TPU implementation of MonteCarloDiscounted.forward."""
    assert reward.ndim == 2 and done.shape == reward.shape
    T, B = reward.shape
    reward = reward.astype(jnp.float32)
    done = done.astype(jnp.float32)

    # ---- batch padding: keep output stores lane-dense (unmasked vst) ----------
    B_pad = ((B + 127) // 128) * 128
    if B_pad != B:
        pad = B_pad - B
        reward = jnp.pad(reward, ((0, 0), (0, pad)))
        done = jnp.pad(done, ((0, 0), (0, pad)))

    # ---- VMEM budget, re-derived per chip (v7x has only 64 MiB / TC) ----------
    try:
        vmem_cap = int(pltpu.get_tpu_info().vmem_capacity_bytes)
    except Exception:  # interpret mode / unknown chip: assume the smallest (v7x)
        vmem_cap = 64 * 1024 * 1024
    budget = int(vmem_cap * 0.55)

    def vmem_estimate(tt: int, b: int) -> int:
        out_bufs = 2 * tt * T * b * 4          # double-buffered output block
        in_bufs = 2 * 2 * T * b * 4            # resident reward + done blocks
        scratch = T * b * 4                    # running carry
        return out_bufs + in_bufs + scratch

    # ---- tile selection: prefer big time blocks, then wide batch tiles --------
    tt_cands = [c for c in (8, 4, 2, 1) if T % c == 0]
    time_block, b_blk = tt_cands[-1], 128
    picked = False
    for tt in tt_cands:
        for b in (512, 256, 128):
            if B_pad % b == 0 and vmem_estimate(tt, b) <= budget:
                time_block, b_blk = tt, b
                picked = True
                break
        if picked:
            break
    ntb = T // time_block
    nb = B_pad // b_blk

    # Rows of the (T, b_blk) carry held in vregs per inner chunk (~64 KiB live).
    row_chunk = max(8, min(T, 8192 // b_blk))

    est = vmem_estimate(time_block, b_blk)
    vmem_limit = int(min(max(est + (16 << 20), 32 << 20), int(vmem_cap * 0.9)))
    vmem_limit = min(max(vmem_limit, est), vmem_cap)

    kernel = functools.partial(
        _mc_discounted_kernel,
        gamma=float(gamma), time_block=time_block, row_chunk=row_chunk)

    out = pl.pallas_call(
        kernel,
        out_shape=jax.ShapeDtypeStruct((T, T, B_pad), jnp.float32),
        grid=(nb, ntb),
        in_specs=[
            # reward / done stay resident for the whole b-block: the block index
            # is constant along the time axis, so they are DMA'd once per b-block.
            pl.BlockSpec((T, b_blk), lambda b, t: (0, b)),
            pl.BlockSpec((T, b_blk), lambda b, t: (0, b)),
        ],
        # Stream `time_block` output planes per step; the index_map performs the
        # reversed iteration over outer-time blocks so the body stays simple.
        out_specs=pl.BlockSpec((time_block, T, b_blk),
                               lambda b, t: (ntb - 1 - t, 0, b)),
        scratch_shapes=[
            pltpu.VMEM((T, b_blk), jnp.float32),   # running carry across steps
        ],
        compiler_params=pltpu.CompilerParams(
            dimension_semantics=("parallel", "arbitrary"),
            vmem_limit_bytes=vmem_limit,
        ),
        cost_estimate=pl.CostEstimate(
            flops=2 * T * T * B_pad + 2 * T * B_pad,
            transcendentals=0,
            bytes_accessed=4 * (T * T * B_pad + 2 * T * B_pad),
        ),
    )(reward, done)

    if B_pad != B:
        out = out[:, :, :B]
    return out


def _reference(reward, done, gamma=0.99):
    """Pure-JAX mirror of the PyTorch loop, for correctness checking."""
    T = reward.shape[0]
    returns = []
    running_add = jnp.zeros_like(done, dtype=jnp.float32)
    for i in reversed(range(T)):
        running_add = reward[i] + (1.0 - done) * gamma * running_add
        returns.insert(0, running_add)
    return jnp.stack(returns)


if __name__ == "__main__":
    gamma = 0.99
    key = jax.random.PRNGKey(0)

    # Cases: (a) lane-aligned single time block, (b) padded batch + multiple time
    # blocks (carry across grid steps), (c) multiple batch blocks (carry reset per
    # b-block) with a wider b_blk.
    for (T, B) in [(8, 128), (16, 96), (16, 1024)]:
        key, k_r, k_d = jax.random.split(key, 3)
        reward = jax.random.normal(k_r, (T, B), dtype=jnp.float32)
        done = (jax.random.uniform(k_d, (T, B)) < 0.2).astype(jnp.float32)

        out = jax.block_until_ready(monte_carlo_discounted(reward, done, gamma))
        ref = _reference(reward, done, gamma)
        assert out.shape == ref.shape == (T, T, B), (out.shape, ref.shape)
        assert jnp.allclose(out, ref, atol=1e-5, rtol=1e-5), f"mismatch at {(T, B)}"

    print("KERNEL_OK")
</pallas_src>

<mosaic_0001>
module attributes {stable_mosaic.version = 11 : i64} {
  func.func @_mc_discounted_kernel(%arg0: i32, %arg1: i32, %arg2: memref<8x128xf32, #tpu.memory_space<vmem>>, %arg3: memref<8x128xf32, #tpu.memory_space<vmem>>, %arg4: memref<8x8x128xf32, #tpu.memory_space<vmem>>, %arg5: memref<8x128xf32, #tpu.memory_space<vmem>>) attributes {dimension_semantics = [#tpu.dimension_semantics<parallel>, #tpu.dimension_semantics<arbitrary>], iteration_bounds = array<i64: 1, 1>, scalar_prefetch = 0 : i64, scratch_operands = 1 : i64, tpu.core_type = #tpu.core_type<tc>, window_params = [{transform_indices = @transform_0, window_bounds = array<i64: 8, 128>}, {transform_indices = @transform_1, window_bounds = array<i64: 8, 128>}, {transform_indices = @transform_2, window_bounds = array<i64: 8, 8, 128>}]} {
    %c0_i32 = arith.constant 0 : i32
    %0 = arith.cmpi eq, %arg1, %c0_i32 : i32
    %1 = arith.extui %0 : i1 to i32
    %c0_i32_0 = arith.constant 0 : i32
    %2 = arith.cmpi ne, %1, %c0_i32_0 : i32
    scf.if %2 {
      %cst_34 = arith.constant 0.000000e+00 : f32
      %84 = vector.broadcast %cst_34 : f32 to vector<8x128xf32>
      %c0_35 = arith.constant 0 : index
      %c0_36 = arith.constant 0 : index
      %85 = vector.load %arg5[%c0_35, %c0_36] : memref<8x128xf32, #tpu.memory_space<vmem>>, vector<8x128xf32>
      tpu.vector_store %arg5[%c0_35, %c0_36], %84 {strides = array<i32>} : memref<8x128xf32, #tpu.memory_space<vmem>>, vector<8x128xf32>,
    } else {
    }
    %c0_i32_1 = arith.constant 0 : i32
    %3 = arith.subi %c0_i32_1, %arg1 : i32
    %c8_i32 = arith.constant 8 : i32
    %4 = arith.muli %3, %c8_i32 : i32
    %c0 = arith.constant 0 : index
    %c0_2 = arith.constant 0 : index
    %5 = vector.load %arg3[%c0, %c0_2] : memref<8x128xf32, #tpu.memory_space<vmem>>, vector<8x128xf32>
    %cst = arith.constant 1.000000e+00 : f32
    %6 = vector.broadcast %cst : f32 to vector<8x128xf32>
    %7 = arith.subf %6, %5 : vector<8x128xf32>
    %cst_3 = arith.constant 9.900000e-01 : f32
    %8 = vector.broadcast %cst_3 : f32 to vector<8x128xf32>
    %9 = arith.mulf %7, %8 : vector<8x128xf32>
    %c0_4 = arith.constant 0 : index
    %c0_5 = arith.constant 0 : index
    %10 = vector.load %arg5[%c0_4, %c0_5] : memref<8x128xf32, #tpu.memory_space<vmem>>, vector<8x128xf32>
    %c7_i32 = arith.constant 7 : i32
    %11 = arith.addi %4, %c7_i32 : i32
    %12 = arith.index_cast %11 : i32 to index
    %c0_6 = arith.constant 0 : index
    %13 = vector.load %arg2[%12, %c0_6] : memref<8x128xf32, #tpu.memory_space<vmem>>, vector<1x128xf32>
    %14 = arith.mulf %9, %10 : vector<8x128xf32>
    %15 = vector.broadcast %13 : vector<1x128xf32> to vector<8x128xf32>
    %16 = arith.addf %15, %14 : vector<8x128xf32>
    %c7 = arith.constant 7 : index
    %c0_7 = arith.constant 0 : index
    %c0_8 = arith.constant 0 : index
    %17 = vector.load %arg4[%c7, %c0_7, %c0_8] : memref<8x8x128xf32, #tpu.memory_space<vmem>>, vector<1x8x128xf32>
    %18 = vector.shape_cast %17 : vector<1x8x128xf32> to vector<8x128xf32>
    %19 = vector.shape_cast %16 : vector<8x128xf32> to vector<1x8x128xf32>
    tpu.vector_store %arg4[%c7, %c0_7, %c0_8], %19 {strides = array<i32>} : memref<8x8x128xf32, #tpu.memory_space<vmem>>, vector<1x8x128xf32>,
    %c6_i32 = arith.constant 6 : i32
    %20 = arith.addi %4, %c6_i32 : i32
    %21 = arith.index_cast %20 : i32 to index
    %c0_9 = arith.constant 0 : index
    %22 = vector.load %arg2[%21, %c0_9] : memref<8x128xf32, #tpu.memory_space<vmem>>, vector<1x128xf32>
    %23 = arith.mulf %9, %16 : vector<8x128xf32>
    %24 = vector.broadcast %22 : vector<1x128xf32> to vector<8x128xf32>
    %25 = arith.addf %24, %23 : vector<8x128xf32>
    %c6 = arith.constant 6 : index
    %c0_10 = arith.constant 0 : index
    %c0_11 = arith.constant 0 : index
    %26 = vector.load %arg4[%c6, %c0_10, %c0_11] : memref<8x8x128xf32, #tpu.memory_space<vmem>>, vector<1x8x128xf32>
    %27 = vector.shape_cast %26 : vector<1x8x128xf32> to vector<8x128xf32>
    %28 = vector.shape_cast %25 : vector<8x128xf32> to vector<1x8x128xf32>
    tpu.vector_store %arg4[%c6, %c0_10, %c0_11], %28 {strides = array<i32>} : memref<8x8x128xf32, #tpu.memory_space<vmem>>, vector<1x8x128xf32>,
    %c5_i32 = arith.constant 5 : i32
    %29 = arith.addi %4, %c5_i32 : i32
    %30 = arith.index_cast %29 : i32 to index
    %c0_12 = arith.constant 0 : index
    %31 = vector.load %arg2[%30, %c0_12] : memref<8x128xf32, #tpu.memory_space<vmem>>, vector<1x128xf32>
    %32 = arith.mulf %9, %25 : vector<8x128xf32>
    %33 = vector.broadcast %31 : vector<1x128xf32> to vector<8x128xf32>
    %34 = arith.addf %33, %32 : vector<8x128xf32>
    %c5 = arith.constant 5 : index
    %c0_13 = arith.constant 0 : index
    %c0_14 = arith.constant 0 : index
    %35 = vector.load %arg4[%c5, %c0_13, %c0_14] : memref<8x8x128xf32, #tpu.memory_space<vmem>>, vector<1x8x128xf32>
    %36 = vector.shape_cast %35 : vector<1x8x128xf32> to vector<8x128xf32>
    %37 = vector.shape_cast %34 : vector<8x128xf32> to vector<1x8x128xf32>
    tpu.vector_store %arg4[%c5, %c0_13, %c0_14], %37 {strides = array<i32>} : memref<8x8x128xf32, #tpu.memory_space<vmem>>, vector<1x8x128xf32>,
    %c4_i32 = arith.constant 4 : i32
    %38 = arith.addi %4, %c4_i32 : i32
    %39 = arith.index_cast %38 : i32 to index
    %c0_15 = arith.constant 0 : index
    %40 = vector.load %arg2[%39, %c0_15] : memref<8x128xf32, #tpu.memory_space<vmem>>, vector<1x128xf32>
    %41 = arith.mulf %9, %34 : vector<8x128xf32>
    %42 = vector.broadcast %40 : vector<1x128xf32> to vector<8x128xf32>
    %43 = arith.addf %42, %41 : vector<8x128xf32>
    %c4 = arith.constant 4 : index
    %c0_16 = arith.constant 0 : index
    %c0_17 = arith.constant 0 : index
    %44 = vector.load %arg4[%c4, %c0_16, %c0_17] : memref<8x8x128xf32, #tpu.memory_space<vmem>>, vector<1x8x128xf32>
    %45 = vector.shape_cast %44 : vector<1x8x128xf32> to vector<8x128xf32>
    %46 = vector.shape_cast %43 : vector<8x128xf32> to vector<1x8x128xf32>
    tpu.vector_store %arg4[%c4, %c0_16, %c0_17], %46 {strides = array<i32>} : memref<8x8x128xf32, #tpu.memory_space<vmem>>, vector<1x8x128xf32>,
    %c3_i32 = arith.constant 3 : i32
    %47 = arith.addi %4, %c3_i32 : i32
    %48 = arith.index_cast %47 : i32 to index
    %c0_18 = arith.constant 0 : index
    %49 = vector.load %arg2[%48, %c0_18] : memref<8x128xf32, #tpu.memory_space<vmem>>, vector<1x128xf32>
    %50 = arith.mulf %9, %43 : vector<8x128xf32>
    %51 = vector.broadcast %49 : vector<1x128xf32> to vector<8x128xf32>
    %52 = arith.addf %51, %50 : vector<8x128xf32>
    %c3 = arith.constant 3 : index
    %c0_19 = arith.constant 0 : index
    %c0_20 = arith.constant 0 : index
    %53 = vector.load %arg4[%c3, %c0_19, %c0_20] : memref<8x8x128xf32, #tpu.memory_space<vmem>>, vector<1x8x128xf32>
    %54 = vector.shape_cast %53 : vector<1x8x128xf32> to vector<8x128xf32>
    %55 = vector.shape_cast %52 : vector<8x128xf32> to vector<1x8x128xf32>
    tpu.vector_store %arg4[%c3, %c0_19, %c0_20], %55 {strides = array<i32>} : memref<8x8x128xf32, #tpu.memory_space<vmem>>, vector<1x8x128xf32>,
    %c2_i32 = arith.constant 2 : i32
    %56 = arith.addi %4, %c2_i32 : i32
    %57 = arith.index_cast %56 : i32 to index
    %c0_21 = arith.constant 0 : index
    %58 = vector.load %arg2[%57, %c0_21] : memref<8x128xf32, #tpu.memory_space<vmem>>, vector<1x128xf32>
    %59 = arith.mulf %9, %52 : vector<8x128xf32>
    %60 = vector.broadcast %58 : vector<1x128xf32> to vector<8x128xf32>
    %61 = arith.addf %60, %59 : vector<8x128xf32>
    %c2 = arith.constant 2 : index
    %c0_22 = arith.constant 0 : index
    %c0_23 = arith.constant 0 : index
    %62 = vector.load %arg4[%c2, %c0_22, %c0_23] : memref<8x8x128xf32, #tpu.memory_space<vmem>>, vector<1x8x128xf32>
    %63 = vector.shape_cast %62 : vector<1x8x128xf32> to vector<8x128xf32>
    %64 = vector.shape_cast %61 : vector<8x128xf32> to vector<1x8x128xf32>
    tpu.vector_store %arg4[%c2, %c0_22, %c0_23], %64 {strides = array<i32>} : memref<8x8x128xf32, #tpu.memory_space<vmem>>, vector<1x8x128xf32>,
    %c1_i32 = arith.constant 1 : i32
    %65 = arith.addi %4, %c1_i32 : i32
    %66 = arith.index_cast %65 : i32 to index
    %c0_24 = arith.constant 0 : index
    %67 = vector.load %arg2[%66, %c0_24] : memref<8x128xf32, #tpu.memory_space<vmem>>, vector<1x128xf32>
    %68 = arith.mulf %9, %61 : vector<8x128xf32>
    %69 = vector.broadcast %67 : vector<1x128xf32> to vector<8x128xf32>
    %70 = arith.addf %69, %68 : vector<8x128xf32>
    %c1 = arith.constant 1 : index
    %c0_25 = arith.constant 0 : index
    %c0_26 = arith.constant 0 : index
    %71 = vector.load %arg4[%c1, %c0_25, %c0_26] : memref<8x8x128xf32, #tpu.memory_space<vmem>>, vector<1x8x128xf32>
    %72 = vector.shape_cast %71 : vector<1x8x128xf32> to vector<8x128xf32>
    %73 = vector.shape_cast %70 : vector<8x128xf32> to vector<1x8x128xf32>
    tpu.vector_store %arg4[%c1, %c0_25, %c0_26], %73 {strides = array<i32>} : memref<8x8x128xf32, #tpu.memory_space<vmem>>, vector<1x8x128xf32>,
    %c0_i32_27 = arith.constant 0 : i32
    %74 = arith.addi %4, %c0_i32_27 : i32
    %75 = arith.index_cast %74 : i32 to index
    %c0_28 = arith.constant 0 : index
    %76 = vector.load %arg2[%75, %c0_28] : memref<8x128xf32, #tpu.memory_space<vmem>>, vector<1x128xf32>
    %77 = arith.mulf %9, %70 : vector<8x128xf32>
    %78 = vector.broadcast %76 : vector<1x128xf32> to vector<8x128xf32>
    %79 = arith.addf %78, %77 : vector<8x128xf32>
    %c0_29 = arith.constant 0 : index
    %c0_30 = arith.constant 0 : index
    %c0_31 = arith.constant 0 : index
    %80 = vector.load %arg4[%c0_29, %c0_30, %c0_31] : memref<8x8x128xf32, #tpu.memory_space<vmem>>, vector<1x8x128xf32>
    %81 = vector.shape_cast %80 : vector<1x8x128xf32> to vector<8x128xf32>
    %82 = vector.shape_cast %79 : vector<8x128xf32> to vector<1x8x128xf32>
    tpu.vector_store %arg4[%c0_29, %c0_30, %c0_31], %82 {strides = array<i32>} : memref<8x8x128xf32, #tpu.memory_space<vmem>>, vector<1x8x128xf32>,
    %c0_32 = arith.constant 0 : index
    %c0_33 = arith.constant 0 : index
    %83 = vector.load %arg5[%c0_32, %c0_33] : memref<8x128xf32, #tpu.memory_space<vmem>>, vector<8x128xf32>
    tpu.vector_store %arg5[%c0_32, %c0_33], %79 {strides = array<i32>} : memref<8x128xf32, #tpu.memory_space<vmem>>, vector<8x128xf32>,
    return
  }
  func.func @transform_0(%arg0: i32, %arg1: i32) -> (i32, i32) {
    %c0_i32 = arith.constant 0 : i32
    %c0_i32_0 = arith.constant 0 : i32
    return %c0_i32, %arg0 : i32, i32
  }
  func.func @transform_1(%arg0: i32, %arg1: i32) -> (i32, i32) {
    %c0_i32 = arith.constant 0 : i32
    %c0_i32_0 = arith.constant 0 : i32
    return %c0_i32, %arg0 : i32, i32
  }
  func.func @transform_2(%arg0: i32, %arg1: i32) -> (i32, i32, i32) {
    %c0_i32 = arith.constant 0 : i32
    %0 = arith.subi %c0_i32, %arg1 : i32
    %c0_i32_0 = arith.constant 0 : i32
    %c0_i32_1 = arith.constant 0 : i32
    return %0, %c0_i32_0, %arg0 : i32, i32, i32
  }
}

</mosaic_0001>

<llo_original>
// kernel: tpu_custom_call.1
$region0: #{tpu_custom_call.1}
  #allocation0 [shape = 'u32[]', space=smem, size = 0x4, offset = 0x4, fixed_abs, tag = 'smem constant byte address 0x4 - core index']
  #allocation1 [shape = 'u32[72,128]{1,0:T(1,128)}', space=vmem, size = 0x9000, scoped, tag = 'internal scratch']
  #allocation2 [shape = 'f32[8,128]{1,0:T(8,128)}', space=vmem, size = 0x1000, scoped, tag = 'scratch operand']
  %s0 = inlined_call_operand.hbm [shape: f32[8,128], index: 0, kind: input, shape index: {}]
  %s1 = inlined_call_operand.hbm [shape: f32[8,128], index: 1, kind: input, shape index: {}]
  %s2 = inlined_call_operand.hbm [shape: f32[8,8,128], index: 2, kind: output, shape index: {}]
  %s3 = sld [smem:[#allocation0]]
  $region30: #{tpu_custom_call.1} parent=0
    _
  %s5 = ssub.s32 1, %s3
  %s6 = scalar_select 0, %s5, %s3
  $region1: #{tpu_custom_call.1} parent=0
    #allocation3 [shape = 'u8[4096]{0}', space=vmem, size = 0x1000, scoped, tag = 'input window, operand 0, single buffered']
    #allocation4 [shape = 's32[1]{0}', space=sflag, size = 0x4, scoped, tag = 'scoped memory for tpu_custom_call.1']
    #allocation5 [shape = 's32[1]{0}', space=sflag, size = 0x4, scoped, tag = 'scoped memory for tpu_custom_call.1']
    #allocation6 [shape = 'u8[4096]{0}', space=vmem, size = 0x1000, scoped, tag = 'input window, operand 1, single buffered']
    #allocation7 [shape = 's32[1]{0}', space=sflag, size = 0x4, scoped, tag = 'scoped memory for tpu_custom_call.1']
    #allocation8 [shape = 'u8[32768]{0}', space=vmem, size = 0x8000, scoped, tag = 'output window, operand 0, single buffered']
    %7 = vsyncpa [#allocation4], 0
    %8 = vsyncpa [#allocation7], 0
    %9 = vsyncpa [#allocation5], 0
    // Predicated region
    $region2: #{tpu_custom_call.1} parent=1 // pred_check
      _
    $region3: #{tpu_custom_call.1} parent=1 // pred_check_branch
      %11 = sbr.rel (0) target = $region5
    $region4: #{tpu_custom_call.1} parent=1 // pred_region
      %13 = vsyncadd [#allocation4], 0
      %s15 = sshll.u32 %s0, 4
      %s16 = int_to_ptr.hbm [resolvable:$true] %s15
      %s17 = sshll.u32 [#allocation3], 4
      %s18 = int_to_ptr.vmem [resolvable:$true] %s17
      %20 = dma.hbm_to_vmem [thread:$0]  %s16, 128, %s18, [#allocation4]
    $region5: #{tpu_custom_call.1} parent=1 // pred_fallthru
      _
    // Predicated region
    $region6: #{tpu_custom_call.1} parent=1 // pred_check
      _
    $region7: #{tpu_custom_call.1} parent=1 // pred_check_branch
      %22 = sbr.rel (0) target = $region9
    $region8: #{tpu_custom_call.1} parent=1 // pred_region
      %24 = vsyncadd [#allocation7], 0
      %s26 = sshll.u32 %s1, 4
      %s27 = int_to_ptr.hbm [resolvable:$true] %s26
      %s28 = sshll.u32 [#allocation6], 4
      %s29 = int_to_ptr.vmem [resolvable:$true] %s28
      %31 = dma.hbm_to_vmem [thread:$0]  %s27, 128, %s29, [#allocation7]
    $region9: #{tpu_custom_call.1} parent=1 // pred_fallthru
      _
    // Predicated region
    $region10: #{tpu_custom_call.1} parent=1 // pred_check
      _
    $region11: #{tpu_custom_call.1} parent=1 // pred_check_branch
      %33 = sbr.rel (0) target = $region13
    $region12: #{tpu_custom_call.1} parent=1 // pred_region
      %35 = dma.done [#allocation4], 128
    $region13: #{tpu_custom_call.1} parent=1 // pred_fallthru
      _
    // Predicated region
    $region14: #{tpu_custom_call.1} parent=1 // pred_check
      _
    $region15: #{tpu_custom_call.1} parent=1 // pred_check_branch
      %37 = sbr.rel (0) target = $region17
    $region16: #{tpu_custom_call.1} parent=1 // pred_region
      %39 = dma.done [#allocation7], 128
    $region17: #{tpu_custom_call.1} parent=1 // pred_fallthru
      _
    %s40 = ssub.s32 0, 0
    %s41 = smul.u32 8, %s40
    %p42 = scmp.eq.s32.totalorder 0, 0
    // Predicated region
    $region18: #{tpu_custom_call.1} parent=1 // pred_check
      %p43 = pneg %p42
    $region19: #{tpu_custom_call.1} parent=1 // pred_check_branch
      %45 = sbr.rel (%p43) target = $region21
    $region20: #{tpu_custom_call.1} parent=1 // pred_region
      %46 = vst [vmem:[#allocation2] sm:$0xff] 0.0
    $region21: #{tpu_custom_call.1} parent=1 // pred_fallthru
      _
    %s47 = ssub.s32 0, 0
    %s48 = smul.u32 %s47, 8
    %v49 = vld [vmem:[#allocation6] sm:$0xff]
    %v50 = vsub.f32 1.0, %v49
    %v51 = vmul.f32 %v50, 0.99
    %v52 = vld [vmem:[#allocation2] sm:$0xff]
    %s53 = sadd.s32 %s48, 7
    %s54 = scalar_lea.vmem [#allocation3], %s53
    %v55 = vld [vmem:[%s54] sm:$0x1]
    %v56 = vmul.f32 %v51, %v52
    %v57 = vperm.slane %v55, 0
    %v58 = vadd.f32 %v57, %v56
    %s59 = scalar_lea.vmem [#allocation8], 56
    %60 = vst [vmem:[%s59] sm:$0xff] %v58
    %s61 = sadd.s32 %s48, 6
    %s62 = scalar_lea.vmem [#allocation3], %s61
    %v63 = vld [vmem:[%s62] sm:$0x1]
    %v64 = vmul.f32 %v51, %v58
    %v65 = vperm.slane %v63, 0
    %v66 = vadd.f32 %v65, %v64
    %s67 = scalar_lea.vmem [#allocation8], 48
    %68 = vst [vmem:[%s67] sm:$0xff] %v66
    %s69 = sadd.s32 %s48, 5
    %s70 = scalar_lea.vmem [#allocation3], %s69
    %v71 = vld [vmem:[%s70] sm:$0x1]
    %v72 = vmul.f32 %v51, %v66
    %v73 = vperm.slane %v71, 0
    %v74 = vadd.f32 %v73, %v72
    %s75 = scalar_lea.vmem [#allocation8], 40
    %76 = vst [vmem:[%s75] sm:$0xff] %v74
    %s77 = sadd.s32 %s48, 4
    %s78 = scalar_lea.vmem [#allocation3], %s77
    %v79 = vld [vmem:[%s78] sm:$0x1]
    %v80 = vmul.f32 %v51, %v74
    %v81 = vperm.slane %v79, 0
    %v82 = vadd.f32 %v81, %v80
    %s83 = scalar_lea.vmem [#allocation8], 32
    %84 = vst [vmem:[%s83] sm:$0xff] %v82
    %s85 = sadd.s32 %s48, 3
    %s86 = scalar_lea.vmem [#allocation3], %s85
    %v87 = vld [vmem:[%s86] sm:$0x1]
    %v88 = vmul.f32 %v51, %v82
    %v89 = vperm.slane %v87, 0
    %v90 = vadd.f32 %v89, %v88
    %s91 = scalar_lea.vmem [#allocation8], 24
    %92 = vst [vmem:[%s91] sm:$0xff] %v90
    %s93 = sadd.s32 %s48, 2
    %s94 = scalar_lea.vmem [#allocation3], %s93
    %v95 = vld [vmem:[%s94] sm:$0x1]
    %v96 = vmul.f32 %v51, %v90
    %v97 = vperm.slane %v95, 0
    %v98 = vadd.f32 %v97, %v96
    %s99 = scalar_lea.vmem [#allocation8], 16
    %100 = vst [vmem:[%s99] sm:$0xff] %v98
    %s101 = sadd.s32 %s48, 1
    %s102 = scalar_lea.vmem [#allocation3], %s101
    %v103 = vld [vmem:[%s102] sm:$0x1]
    %v104 = vmul.f32 %v51, %v98
    %v105 = vperm.slane %v103, 0
    %v106 = vadd.f32 %v105, %v104
    %s107 = scalar_lea.vmem [#allocation8], 8
    %108 = vst [vmem:[%s107] sm:$0xff] %v106
    %s109 = scalar_lea.vmem [#allocation3], %s48
    %v110 = vld [vmem:[%s109] sm:$0x1]
    %v111 = vmul.f32 %v51, %v106
    %v112 = vperm.slane %v110, 0
    %v113 = vadd.f32 %v112, %v111
    %114 = vst [vmem:[#allocation8] sm:$0xff] %v113
    %115 = vst [vmem:[#allocation2] sm:$0xff] %v113
    // Predicated region
    $region22: #{tpu_custom_call.1} parent=1 // pred_check
      _
    $region23: #{tpu_custom_call.1} parent=1 // pred_check_branch
      %117 = sbr.rel (0) target = $region25
    $region24: #{tpu_custom_call.1} parent=1 // pred_region
      %s118 = ssub.s32 0, 0
      %s119 = smul.u32 8, %s118
      %121 = vsyncadd [#allocation5], 0
      %s122 = smul.addr %s119, 8
      %s123 = scalar_lea.hbm %s2, %s122
      %s124 = sshll.u32 [#allocation8], 4
      %s125 = int_to_ptr.vmem [resolvable:$true] %s124
      %s126 = sshll.u32 %s123, 4
      %s127 = int_to_ptr.hbm [resolvable:$true] %s126
      %132 = dma.vmem_to_hbm [thread:$0]  %s125, 1024, %s127, [#allocation5], 128, 128, 8
    $region25: #{tpu_custom_call.1} parent=1 // pred_fallthru
      _
    // Predicated region
    $region26: #{tpu_custom_call.1} parent=1 // pred_check
      _
    $region27: #{tpu_custom_call.1} parent=1 // pred_check_branch
      %134 = sbr.rel (0) target = $region29
    $region28: #{tpu_custom_call.1} parent=1 // pred_region
      %136 = dma.done [#allocation5], 1024
    $region29: #{tpu_custom_call.1} parent=1 // pred_fallthru
      _
    %137 = vsyncpa [#allocation4], 1
    %138 = vsyncpa [#allocation7], 1
    %139 = vsyncpa [#allocation5], 1

</llo_original>
